<compile_context>
chip_gen: v6e
topology: v6e:2x2x1
jax: 0.10.0
libtpu: 0.0.40
codegen_flags: <defaults>
</compile_context>

<pallas_src>
import functools

import jax
import jax.numpy as jnp
from jax.experimental import pallas as pl
from jax.experimental.pallas import tpu as pltpu


def _round_up(x, m):
    return ((x + m - 1) // m) * m


def _time_block(t):
    for tb in (8, 4, 2, 1):
        if t % tb == 0:
            return tb
    return 1


# ---------------------------------------------------------------------------
# Generic dense kernel: (M, K) @ (K, N) + (1, N).  Used for the (off-critical-
# path) input projection prologue and the deferred FC head epilogue, both with
# M = T * Bp so the MXU sees a big M instead of the tiny per-step batch.
# ---------------------------------------------------------------------------
def _dense_kernel(x_ref, w_ref, b_ref, o_ref):
    o_ref[...] = (
        jnp.dot(x_ref[...], w_ref[...], preferred_element_type=jnp.float32)
        + b_ref[...]
    ).astype(o_ref.dtype)


def _dense(x, w, b):
    M, K = x.shape
    N = w.shape[1]
    mt = M
    if M > 1024:  # tile M for long sequences; K/N are already lane-padded
        for cand in (1024, 512, 256, 128, 64, 32, 16, 8):
            if M % cand == 0:
                mt = cand
                break
    return pl.pallas_call(
        _dense_kernel,
        out_shape=jax.ShapeDtypeStruct((M, N), jnp.float32),
        grid=(M // mt,),
        in_specs=[
            pl.BlockSpec((mt, K), lambda i: (i, 0)),
            pl.BlockSpec((K, N), lambda i: (0, 0)),
            pl.BlockSpec((1, N), lambda i: (0, 0)),
        ],
        out_specs=pl.BlockSpec((mt, N), lambda i: (i, 0)),
        compiler_params=pltpu.CompilerParams(dimension_semantics=("parallel",)),
    )(x, w, b)


# ---------------------------------------------------------------------------
# Recurrence kernel: one grid block == Tb LSTMCell steps.  h/c carried in VMEM.
# Per-step serial chain is only: gates = xproj[s] + h @ W_hh ; elementwise.
# ---------------------------------------------------------------------------
def _lstm_recur_kernel(xproj_ref, h0_ref, c0_ref, whh_ref,
                       h_seq_ref, c_out_ref,
                       h_scr, c_scr, *, hp, tb):
    tblk = pl.program_id(0)

    @pl.when(tblk == 0)
    def _():
        h_scr[...] = h0_ref[...]
        c_scr[...] = c0_ref[...]

    whh = whh_ref[...]          # grid-invariant, VMEM-resident across the whole grid
    h = h_scr[...]
    c = c_scr[...]

    def sigmoid(v):             # single EUP tanh per gate
        return 0.5 * jnp.tanh(0.5 * v) + 0.5

    # Fully-unrolled (static) inner time loop: gives the scheduler visibility to
    # overlap step s's EUP/VPU tail with step s+1's MXU push.
    for s in range(tb):
        gates = xproj_ref[s] + jnp.dot(h, whh, preferred_element_type=jnp.float32)
        i_g = sigmoid(gates[:, 0 * hp:1 * hp])
        f_g = sigmoid(gates[:, 1 * hp:2 * hp])
        g_g = jnp.tanh(gates[:, 2 * hp:3 * hp])
        o_g = sigmoid(gates[:, 3 * hp:4 * hp])
        c = f_g * c + i_g * g_g
        h = o_g * jnp.tanh(c)
        h_seq_ref[s] = h        # lane-dense (Bp, Hp) store into the (Tb, Bp, Hp) block

    # Carry state to the next grid block; final c survives in the resident output.
    h_scr[...] = h
    c_scr[...] = c
    c_out_ref[...] = c


def _lstm_recurrence_padded(xproj_p, h0_p, c0_p, whh_p, *, tb):
    T, Bp, G = xproj_p.shape
    Hp = h0_p.shape[1]
    kernel = functools.partial(_lstm_recur_kernel, hp=Hp, tb=tb)
    inv = lambda t: (0, 0)      # grid-invariant: DMA once, stays VMEM-resident

    h_seq_p, cT_p = pl.pallas_call(
        kernel,
        out_shape=(
            jax.ShapeDtypeStruct((T, Bp, Hp), jnp.float32),
            jax.ShapeDtypeStruct((Bp, Hp), jnp.float32),
        ),
        grid=(T // tb,),
        in_specs=[
            pl.BlockSpec((tb, Bp, G), lambda t: (t, 0, 0)),   # streamed x-projection
            pl.BlockSpec((Bp, Hp), inv),                      # h0
            pl.BlockSpec((Bp, Hp), inv),                      # c0
            pl.BlockSpec((Hp, G), inv),                       # packed W_hh
        ],
        out_specs=(
            pl.BlockSpec((tb, Bp, Hp), lambda t: (t, 0, 0)),  # per-step h
            pl.BlockSpec((Bp, Hp), inv),                      # final c
        ),
        scratch_shapes=[
            pltpu.VMEM((Bp, Hp), jnp.float32),                # carried h
            pltpu.VMEM((Bp, Hp), jnp.float32),                # carried c
        ],
        compiler_params=pltpu.CompilerParams(
            dimension_semantics=("arbitrary",)),              # serial recurrence
    )(xproj_p, h0_p, c0_p, whh_p)
    return h_seq_p, cT_p


# ---------------------------------------------------------------------------
# Parameter handling (PyTorch-shaped params -> lane-padded kernel params)
# ---------------------------------------------------------------------------
def init_params(key, num_features, num_temporal_outputs, hidden_size_lstm):
    ks = jax.random.split(key, 6)
    H, F, O = hidden_size_lstm, num_features, num_temporal_outputs
    s = 1.0 / jnp.sqrt(H)
    w_ih = jax.random.uniform(ks[0], (4 * H, F), jnp.float32, -s, s)
    w_hh = jax.random.uniform(ks[1], (4 * H, H), jnp.float32, -s, s)
    b_ih = jax.random.uniform(ks[2], (4 * H,), jnp.float32, -s, s)
    b_hh = jax.random.uniform(ks[3], (4 * H,), jnp.float32, -s, s)
    w_fc = jax.random.uniform(ks[4], (O, H), jnp.float32, -s, s)
    b_fc = jax.random.uniform(ks[5], (O,), jnp.float32, -s, s)
    return (w_ih, w_hh, b_ih, b_hh, w_fc, b_fc)


def pack_params(params, num_features, hidden_size, num_outputs):
    """Pre-sum biases and pad each gate to its own 128-lane block."""
    w_ih, w_hh, b_ih, b_hh, w_fc, b_fc = params
    F, H, O = num_features, hidden_size, num_outputs
    Fp, Hp, Op = _round_up(F, 128), _round_up(H, 128), _round_up(O, 128)
    G = 4 * Hp

    wih = jnp.zeros((Fp, G), jnp.float32)
    whh = jnp.zeros((Hp, G), jnp.float32)
    b = jnp.zeros((1, G), jnp.float32)
    for k in range(4):  # PyTorch gate order [i, f, g, o]
        wih = wih.at[:F, k * Hp:k * Hp + H].set(w_ih[k * H:(k + 1) * H, :].T)
        whh = whh.at[:H, k * Hp:k * Hp + H].set(w_hh[k * H:(k + 1) * H, :].T)
        b = b.at[0, k * Hp:k * Hp + H].set(
            b_ih[k * H:(k + 1) * H] + b_hh[k * H:(k + 1) * H])

    wfc = jnp.zeros((Hp, Op), jnp.float32).at[:H, :O].set(w_fc.T)
    bfc = jnp.zeros((1, Op), jnp.float32).at[0, :O].set(b_fc)
    return (wih, b, whh, wfc, bfc)


# ---------------------------------------------------------------------------
# Public wrappers
# ---------------------------------------------------------------------------
def lstm_dynamic_sequence(features_seq, h0, c0, packed, dims):
    """Run T fused LSTM_Dynamic steps; returns (h_T, c_T, outputs[T])."""
    F, H, O = dims
    wih_p, b_p, whh_p, wfc_p, bfc_p = packed
    T, B, _ = features_seq.shape
    Bp = _round_up(B, 8)
    Fp, Hp, Op = _round_up(F, 128), _round_up(H, 128), _round_up(O, 128)
    G = 4 * Hp
    tb = _time_block(T)

    x_p = jnp.zeros((T, Bp, Fp), jnp.float32).at[:, :B, :F].set(features_seq)
    h0_p = jnp.zeros((Bp, Hp), jnp.float32).at[:B, :H].set(h0)
    c0_p = jnp.zeros((Bp, Hp), jnp.float32).at[:B, :H].set(c0)

    # Prologue (off the serial path): input projection + pre-summed bias, all T at once.
    xproj_p = _dense(x_p.reshape(T * Bp, Fp), wih_p, b_p).reshape(T, Bp, G)

    # Serial recurrence — the only part that must run step-by-step.
    h_seq_p, cT_p = _lstm_recurrence_padded(xproj_p, h0_p, c0_p, whh_p, tb=tb)

    # Epilogue (off the serial path): FC head over all T*B hidden states at once.
    out_p = _dense(h_seq_p.reshape(T * Bp, Hp), wfc_p, bfc_p).reshape(T, Bp, Op)

    return h_seq_p[-1, :B, :H], cT_p[:B, :H], out_p[:, :B, :O]


def lstm_dynamic_forward(features_t, h_t, c_t, packed, dims):
    """Single LSTMCell step + Linear head (exactly the module's forward)."""
    h_new, c_new, out_seq = lstm_dynamic_sequence(
        features_t[None], h_t, c_t, packed, dims)
    return h_new, c_new, out_seq[0]


# ---------------------------------------------------------------------------
# Pure-JAX reference mirroring torch.nn.LSTMCell + Linear semantics.
# ---------------------------------------------------------------------------
def reference_step(x, h, c, params):
    w_ih, w_hh, b_ih, b_hh, w_fc, b_fc = params
    H = h.shape[1]
    gates = x @ w_ih.T + h @ w_hh.T + b_ih + b_hh
    i = jax.nn.sigmoid(gates[:, 0 * H:1 * H])
    f = jax.nn.sigmoid(gates[:, 1 * H:2 * H])
    g = jnp.tanh(gates[:, 2 * H:3 * H])
    o = jax.nn.sigmoid(gates[:, 3 * H:4 * H])
    c_new = f * c + i * g
    h_new = o * jnp.tanh(c_new)
    out = h_new @ w_fc.T + b_fc
    return h_new, c_new, out


if __name__ == "__main__":
    B = 8              # batch
    NUM_FEATURES = 16  # input_size
    HIDDEN = 32        # hidden_size_lstm
    NUM_OUTPUTS = 8    # num_temporal_outputs
    T = 16             # sequence length (recurrence folded into one pallas_call)

    key = jax.random.PRNGKey(0)
    k_x, k_h, k_c, k_p = jax.random.split(key, 4)

    features_seq = jax.random.normal(k_x, (T, B, NUM_FEATURES), jnp.float32)
    h0 = jax.random.normal(k_h, (B, HIDDEN), jnp.float32)
    c0 = jax.random.normal(k_c, (B, HIDDEN), jnp.float32)

    params = init_params(k_p, NUM_FEATURES, NUM_OUTPUTS, HIDDEN)
    packed = pack_params(params, NUM_FEATURES, HIDDEN, NUM_OUTPUTS)
    dims = (NUM_FEATURES, HIDDEN, NUM_OUTPUTS)

    # Fused T-step kernel path.
    h_T, c_T, out_seq = lstm_dynamic_sequence(features_seq, h0, c0, packed, dims)
    jax.block_until_ready((h_T, c_T, out_seq))

    # Pure-JAX reference loop (per-step module semantics).
    h_ref, c_ref = h0, c0
    outs_ref = []
    for t in range(T):
        h_ref, c_ref, o_ref = reference_step(features_seq[t], h_ref, c_ref, params)
        outs_ref.append(o_ref)
    out_ref_seq = jnp.stack(outs_ref)

    assert jnp.allclose(h_T, h_ref, atol=1e-4, rtol=1e-4)
    assert jnp.allclose(c_T, c_ref, atol=1e-4, rtol=1e-4)
    assert jnp.allclose(out_seq, out_ref_seq, atol=1e-4, rtol=1e-4)

    # Single-step call path (exact module forward signature).
    h1, c1, out1 = lstm_dynamic_forward(features_seq[0], h0, c0, packed, dims)
    jax.block_until_ready((h1, c1, out1))
    h1_ref, c1_ref, out1_ref = reference_step(features_seq[0], h0, c0, params)
    assert jnp.allclose(h1, h1_ref, atol=1e-4, rtol=1e-4)
    assert jnp.allclose(c1, c1_ref, atol=1e-4, rtol=1e-4)
    assert jnp.allclose(out1, out1_ref, atol=1e-4, rtol=1e-4)

    print("KERNEL_OK")
</pallas_src>

<mosaic_0001>
module attributes {stable_mosaic.version = 11 : i64} {
  func.func @_dense_kernel(%arg0: i32, %arg1: memref<128x128xf32, #tpu.memory_space<vmem>>, %arg2: memref<128x512xf32, #tpu.memory_space<vmem>>, %arg3: memref<1x512xf32, #tpu.memory_space<vmem>>, %arg4: memref<128x512xf32, #tpu.memory_space<vmem>>) attributes {dimension_semantics = [#tpu.dimension_semantics<parallel>], iteration_bounds = array<i64: 1>, scalar_prefetch = 0 : i64, scratch_operands = 0 : i64, tpu.core_type = #tpu.core_type<tc>, window_params = [{transform_indices = @transform_0, window_bounds = array<i64: 128, 128>}, {pipeline_mode = #tpu.pipeline_mode<synchronous>, transform_indices = @transform_1, window_bounds = array<i64: 128, 512>}, {pipeline_mode = #tpu.pipeline_mode<synchronous>, transform_indices = @transform_2, window_bounds = array<i64: 1, 512>}, {transform_indices = @transform_3, window_bounds = array<i64: 128, 512>}]} {
    %c0 = arith.constant 0 : index
    %c0_0 = arith.constant 0 : index
    %0 = vector.load %arg1[%c0, %c0_0] : memref<128x128xf32, #tpu.memory_space<vmem>>, vector<128x128xf32>
    %c0_1 = arith.constant 0 : index
    %c0_2 = arith.constant 0 : index
    %1 = vector.load %arg2[%c0_1, %c0_2] : memref<128x512xf32, #tpu.memory_space<vmem>>, vector<128x512xf32>
    %cst = arith.constant dense<0.000000e+00> : vector<128x512xf32>
    %2 = tpu.matmul %0, %1, %cst {dimension_numbers = #tpu.dot_dimension_numbers<[1], [0], [0], [1], [0, 0, 1, 1], [], []>} : vector<128x128xf32>, vector<128x512xf32>, vector<128x512xf32> -> vector<128x512xf32>
    %c0_3 = arith.constant 0 : index
    %c0_4 = arith.constant 0 : index
    %3 = vector.load %arg3[%c0_3, %c0_4] : memref<1x512xf32, #tpu.memory_space<vmem>>, vector<1x512xf32>
    %4 = vector.broadcast %3 : vector<1x512xf32> to vector<128x512xf32>
    %5 = arith.addf %2, %4 : vector<128x512xf32>
    %c0_5 = arith.constant 0 : index
    %c0_6 = arith.constant 0 : index
    %6 = vector.load %arg4[%c0_5, %c0_6] : memref<128x512xf32, #tpu.memory_space<vmem>>, vector<128x512xf32>
    tpu.vector_store %arg4[%c0_5, %c0_6], %5 {strides = array<i32>} : memref<128x512xf32, #tpu.memory_space<vmem>>, vector<128x512xf32>,
    return
  }
  func.func @transform_0(%arg0: i32) -> (i32, i32) {
    %c0_i32 = arith.constant 0 : i32
    %c0_i32_0 = arith.constant 0 : i32
    return %arg0, %c0_i32 : i32, i32
  }
  func.func @transform_1(%arg0: i32) -> (i32, i32) {
    %c0_i32 = arith.constant 0 : i32
    %c0_i32_0 = arith.constant 0 : i32
    %c0_i32_1 = arith.constant 0 : i32
    return %c0_i32, %c0_i32_0 : i32, i32
  }
  func.func @transform_2(%arg0: i32) -> (i32, i32) {
    %c0_i32 = arith.constant 0 : i32
    %c0_i32_0 = arith.constant 0 : i32
    %c0_i32_1 = arith.constant 0 : i32
    return %c0_i32, %c0_i32_0 : i32, i32
  }
  func.func @transform_3(%arg0: i32) -> (i32, i32) {
    %c0_i32 = arith.constant 0 : i32
    %c0_i32_0 = arith.constant 0 : i32
    return %arg0, %c0_i32 : i32, i32
  }
}

</mosaic_0001>

<llo_original>
// kernel: tpu_custom_call.1
$region0: #{tpu_custom_call.1}
  #allocation0 [shape = 'u32[]', space=smem, size = 0x4, offset = 0x4, fixed_abs, tag = 'smem constant byte address 0x4 - core index']
  #allocation1 [shape = 'u32[144,128]{1,0:T(1,128)}', space=vmem, size = 0x12000, scoped, tag = 'internal scratch']
  %s0 = inlined_call_operand.hbm [shape: f32[128,128], index: 0, kind: input, shape index: {}]
  %s1 = inlined_call_operand.hbm [shape: f32[128,512], index: 1, kind: input, shape index: {}]
  %s2 = inlined_call_operand.hbm [shape: f32[1,512], index: 2, kind: input, shape index: {}]
  %s3 = inlined_call_operand.hbm [shape: f32[128,512], index: 3, kind: output, shape index: {}]
  %s4 = sld [smem:[#allocation0]]
  $region34: #{tpu_custom_call.1} parent=0
    _
  %s6 = ssub.s32 1, %s4
  %s7 = scalar_select 0, %s6, %s4
  $region1: #{tpu_custom_call.1} parent=0
    #allocation2 [shape = 'u8[65536]{0}', space=vmem, size = 0x10000, scoped, tag = 'input window, operand 0, single buffered']
    #allocation3 [shape = 's32[1]{0}', space=sflag, size = 0x4, scoped, tag = 'scoped memory for tpu_custom_call.1']
    #allocation4 [shape = 's32[1]{0}', space=sflag, size = 0x4, scoped, tag = 'scoped memory for tpu_custom_call.1']
    #allocation5 [shape = 'u8[262144]{0}', space=vmem, size = 0x40000, scoped, tag = 'input window, operand 1, single buffered']
    #allocation6 [shape = 's32[1]{0}', space=sflag, size = 0x4, scoped, tag = 'scoped memory for tpu_custom_call.1']
    #allocation7 [shape = 'u8[2048]{0}', space=vmem, size = 0x800, scoped, tag = 'input window, operand 2, single buffered']
    #allocation8 [shape = 'u8[262144]{0}', space=vmem, size = 0x40000, scoped, tag = 'output window, operand 0, single buffered']
    %8 = vsyncpa [#allocation3], 0
    %9 = vsyncpa [#allocation6], 0
    %10 = vsyncpa [#allocation4], 0
    // Predicated region
    $region2: #{tpu_custom_call.1} parent=1 // pred_check
      _
    $region3: #{tpu_custom_call.1} parent=1 // pred_check_branch
      %12 = sbr.rel (0) target = $region5
    $region4: #{tpu_custom_call.1} parent=1 // pred_region
      %s14 = ssub.s32 2048, 2048
      %15 = vsyncadd [#allocation3], %s14
      %s16 = sshll.u32 [#allocation2], 4
      %s17 = int_to_ptr.vmem [resolvable:$true] %s16
      %22 = dma.hbm_to_vmem [thread:$0]  %s0, 2048, %s17, [#allocation3], 128, 128, 8
    $region5: #{tpu_custom_call.1} parent=1 // pred_fallthru
      _
    // Predicated region
    $region6: #{tpu_custom_call.1} parent=1 // pred_check
      _
    $region7: #{tpu_custom_call.1} parent=1 // pred_check_branch
      %24 = sbr.rel (0) target = $region9
    $region8: #{tpu_custom_call.1} parent=1 // pred_region
      %s26 = ssub.s32 8192, 8192
      %27 = vsyncadd [#allocation6], %s26
      %s28 = sshll.u32 [#allocation5], 4
      %s29 = int_to_ptr.vmem [resolvable:$true] %s28
      %34 = dma.hbm_to_vmem [thread:$0]  %s1, 8192, %s29, [#allocation6], 512, 512, 32
    $region9: #{tpu_custom_call.1} parent=1 // pred_fallthru
      _
    // Predicated region
    $region10: #{tpu_custom_call.1} parent=1 // pred_check
      _
    $region11: #{tpu_custom_call.1} parent=1 // pred_check_branch
      %36 = sbr.rel (0) target = $region13
    $region12: #{tpu_custom_call.1} parent=1 // pred_region
      %s38 = ssub.s32 64, 64
      %39 = vsyncadd [#allocation6], %s38
      %s41 = sshll.u32 [#allocation7], 4
      %s42 = int_to_ptr.vmem [resolvable:$true] %s41
      %44 = dma.hbm_to_vmem [thread:$0]  %s2, 64, %s42, [#allocation6]
    $region13: #{tpu_custom_call.1} parent=1 // pred_fallthru
      _
    // Predicated region
    $region14: #{tpu_custom_call.1} parent=1 // pred_check
      _
    $region15: #{tpu_custom_call.1} parent=1 // pred_check_branch
      %46 = sbr.rel (0) target = $region17
    $region16: #{tpu_custom_call.1} parent=1 // pred_region
      %47 = dma.done [#allocation3], 2048
    $region17: #{tpu_custom_call.1} parent=1 // pred_fallthru
      _
    // Predicated region
    $region18: #{tpu_custom_call.1} parent=1 // pred_check
      _
    $region19: #{tpu_custom_call.1} parent=1 // pred_check_branch
      %49 = sbr.rel (0) target = $region21
    $region20: #{tpu_custom_call.1} parent=1 // pred_region
      %50 = dma.done [#allocation6], 8192
    $region21: #{tpu_custom_call.1} parent=1 // pred_fallthru
      _
    // Predicated region
    $region22: #{tpu_custom_call.1} parent=1 // pred_check
      _
    $region23: #{tpu_custom_call.1} parent=1 // pred_check_branch
      %52 = sbr.rel (0) target = $region25
    $region24: #{tpu_custom_call.1} parent=1 // pred_region
      %53 = dma.done [#allocation6], 64
    $region25: #{tpu_custom_call.1} parent=1 // pred_fallthru
      _
    %v54 = vld [vmem:[#allocation2] sm:$0xff]
    %v55 = vld [vmem:[#allocation2 + $0x8] sm:$0xff]
    %v56 = vld [vmem:[#allocation2 + $0x10] sm:$0xff]
    %v57 = vld [vmem:[#allocation2 + $0x18] sm:$0xff]
    %v58 = vld [vmem:[#allocation2 + $0x20] sm:$0xff]
    %v59 = vld [vmem:[#allocation2 + $0x28] sm:$0xff]
    %v60 = vld [vmem:[#allocation2 + $0x30] sm:$0xff]
    %v61 = vld [vmem:[#allocation2 + $0x38] sm:$0xff]
    %v62 = vld [vmem:[#allocation2 + $0x40] sm:$0xff]
    %v63 = vld [vmem:[#allocation2 + $0x48] sm:$0xff]
    %v64 = vld [vmem:[#allocation2 + $0x50] sm:$0xff]
    %v65 = vld [vmem:[#allocation2 + $0x58] sm:$0xff]
    %v66 = vld [vmem:[#allocation2 + $0x60] sm:$0xff]
    %v67 = vld [vmem:[#allocation2 + $0x68] sm:$0xff]
    %v68 = vld [vmem:[#allocation2 + $0x70] sm:$0xff]
    %v69 = vld [vmem:[#allocation2 + $0x78] sm:$0xff]
    %v70 = vld [vmem:[#allocation5] sm:$0xff]
    %v71 = vld [vmem:[#allocation5 + $0x8] sm:$0xff]
    %v72 = vld [vmem:[#allocation5 + $0x10] sm:$0xff]
    %v73 = vld [vmem:[#allocation5 + $0x18] sm:$0xff]
    %v74 = vld [vmem:[#allocation5 + $0x20] sm:$0xff]
    %v75 = vld [vmem:[#allocation5 + $0x28] sm:$0xff]
    %v76 = vld [vmem:[#allocation5 + $0x30] sm:$0xff]
    %v77 = vld [vmem:[#allocation5 + $0x38] sm:$0xff]
    %v78 = vld [vmem:[#allocation5 + $0x40] sm:$0xff]
    %v79 = vld [vmem:[#allocation5 + $0x48] sm:$0xff]
    %v80 = vld [vmem:[#allocation5 + $0x50] sm:$0xff]
    %v81 = vld [vmem:[#allocation5 + $0x58] sm:$0xff]
    %v82 = vld [vmem:[#allocation5 + $0x60] sm:$0xff]
    %v83 = vld [vmem:[#allocation5 + $0x68] sm:$0xff]
    %v84 = vld [vmem:[#allocation5 + $0x70] sm:$0xff]
    %v85 = vld [vmem:[#allocation5 + $0x78] sm:$0xff]
    %v86 = vld [vmem:[#allocation5 + $0x80] sm:$0xff]
    %v87 = vld [vmem:[#allocation5 + $0x88] sm:$0xff]
    %v88 = vld [vmem:[#allocation5 + $0x90] sm:$0xff]
    %v89 = vld [vmem:[#allocation5 + $0x98] sm:$0xff]
    %v90 = vld [vmem:[#allocation5 + $0xa0] sm:$0xff]
    %v91 = vld [vmem:[#allocation5 + $0xa8] sm:$0xff]
    %v92 = vld [vmem:[#allocation5 + $0xb0] sm:$0xff]
    %v93 = vld [vmem:[#allocation5 + $0xb8] sm:$0xff]
    %v94 = vld [vmem:[#allocation5 + $0xc0] sm:$0xff]
    %v95 = vld [vmem:[#allocation5 + $0xc8] sm:$0xff]
    %v96 = vld [vmem:[#allocation5 + $0xd0] sm:$0xff]
    %v97 = vld [vmem:[#allocation5 + $0xd8] sm:$0xff]
    %v98 = vld [vmem:[#allocation5 + $0xe0] sm:$0xff]
    %v99 = vld [vmem:[#allocation5 + $0xe8] sm:$0xff]
    %v100 = vld [vmem:[#allocation5 + $0xf0] sm:$0xff]
    %v101 = vld [vmem:[#allocation5 + $0xf8] sm:$0xff]
    %v102 = vld [vmem:[#allocation5 + $0x100] sm:$0xff]
    %v103 = vld [vmem:[#allocation5 + $0x108] sm:$0xff]
    %v104 = vld [vmem:[#allocation5 + $0x110] sm:$0xff]
    %v105 = vld [vmem:[#allocation5 + $0x118] sm:$0xff]
    %v106 = vld [vmem:[#allocation5 + $0x120] sm:$0xff]
    %v107 = vld [vmem:[#allocation5 + $0x128] sm:$0xff]
    %v108 = vld [vmem:[#allocation5 + $0x130] sm:$0xff]
    %v109 = vld [vmem:[#allocation5 + $0x138] sm:$0xff]
    %v110 = vld [vmem:[#allocation5 + $0x140] sm:$0xff]
    %v111 = vld [vmem:[#allocation5 + $0x148] sm:$0xff]
    %v112 = vld [vmem:[#allocation5 + $0x150] sm:$0xff]
    %v113 = vld [vmem:[#allocation5 + $0x158] sm:$0xff]
    %v114 = vld [vmem:[#allocation5 + $0x160] sm:$0xff]
    %v115 = vld [vmem:[#allocation5 + $0x168] sm:$0xff]
    %v116 = vld [vmem:[#allocation5 + $0x170] sm:$0xff]
    %v117 = vld [vmem:[#allocation5 + $0x178] sm:$0xff]
    %v118 = vld [vmem:[#allocation5 + $0x180] sm:$0xff]
    %v119 = vld [vmem:[#allocation5 + $0x188] sm:$0xff]
    %v120 = vld [vmem:[#allocation5 + $0x190] sm:$0xff]
    %v121 = vld [vmem:[#allocation5 + $0x198] sm:$0xff]
    %v122 = vld [vmem:[#allocation5 + $0x1a0] sm:$0xff]
    %v123 = vld [vmem:[#allocation5 + $0x1a8] sm:$0xff]
    %v124 = vld [vmem:[#allocation5 + $0x1b0] sm:$0xff]
    %v125 = vld [vmem:[#allocation5 + $0x1b8] sm:$0xff]
    %v126 = vld [vmem:[#allocation5 + $0x1c0] sm:$0xff]
    %v127 = vld [vmem:[#allocation5 + $0x1c8] sm:$0xff]
    %v128 = vld [vmem:[#allocation5 + $0x1d0] sm:$0xff]
    %v129 = vld [vmem:[#allocation5 + $0x1d8] sm:$0xff]
    %v130 = vld [vmem:[#allocation5 + $0x1e0] sm:$0xff]
    %v131 = vld [vmem:[#allocation5 + $0x1e8] sm:$0xff]
    %v132 = vld [vmem:[#allocation5 + $0x1f0] sm:$0xff]
    %v133 = vld [vmem:[#allocation5 + $0x1f8] sm:$0xff]
    %v134 = vld [vmem:[#allocation7] sm:$0xf]
    %v136 = vlaneseq
    %v137 = vshrl.u32 %v136, 7
    %v138 = vsub.s32 0, %v137
    %v139 = vrot.slane %v134, %v138
    %v140 = vlaneseq
    %v141 = vshrl.u32 %v140, 7
    %v142 = vsub.s32 1, %v141
    %v143 = vrot.slane %v134, %v142
    %v144 = vlaneseq
    %v145 = vshrl.u32 %v144, 7
    %v146 = vsub.s32 2, %v145
    %v147 = vrot.slane %v134, %v146
    %v148 = vlaneseq
    %v149 = vshrl.u32 %v148, 7
    %v150 = vsub.s32 3, %v149
    %v151 = vrot.slane %v134, %v150
    %156 = vmatprep.subr.mxu0 %v131
    %157 = vmatpush1.msra.mxu0 %v130
    %158 = vmatprep.subr.mxu0 %v127
    %159 = vmatpush1.msra.mxu0 %v126
    %160 = vmatprep.subr.mxu0 %v123
    %161 = vmatpush1.msra.mxu0 %v122
    %162 = vmatprep.subr.mxu0 %v119
    %163 = vmatpush1.msra.mxu0 %v118
    %164 = vmatprep.subr.mxu0 %v115
    %165 = vmatpush1.msra.mxu0 %v114
    %166 = vmatprep.subr.mxu0 %v111
    %167 = vmatpush1.msra.mxu0 %v110
    %168 = vmatprep.subr.mxu0 %v107
    %169 = vmatpush1.msra.mxu0 %v106
    %170 = vmatprep.subr.mxu0 %v103
    %171 = vmatpush1.msra.mxu0 %v102
    %172 = vmatprep.subr.mxu0 %v99
    %173 = vmatpush1.msra.mxu0 %v98
    %174 = vmatprep.subr.mxu0 %v95
    %175 = vmatpush1.msra.mxu0 %v94
    %176 = vmatprep.subr.mxu0 %v91
    %177 = vmatpush1.msra.mxu0 %v90
    %178 = vmatprep.subr.mxu0 %v87
    %179 = vmatpush1.msra.mxu0 %v86
    %180 = vmatprep.subr.mxu0 %v83
    %181 = vmatpush1.msra.mxu0 %v82
    %182 = vmatprep.subr.mxu0 %v79
    %183 = vmatpush1.msra.mxu0 %v78
    %184 = vmatprep.subr.mxu0 %v75
    %185 = vmatpush1.msra.mxu0 %v74
    %186 = vmatprep.subr.mxu0 %v71
    %187 = vmatpush1.msra.mxu0 %v70
    %188 = vmatprep.subr.mxu0 0.0
    %189 = vmatpush2.msra.mxu0 0.0
    %190 = vmatprep.subr.mxu0 0.0
    %191 = vmatpush2.msra.mxu0 0.0
    %192 = vmatprep.subr.mxu0 0.0
    %193 = vmatpush2.msra.mxu0 0.0
    %194 = vmatprep.subr.mxu0 0.0
    %195 = vmatpush2.msra.mxu0 0.0
    %196 = vmatprep.subr.mxu0 0.0
    %197 = vmatpush2.msra.mxu0 0.0
    %198 = vmatprep.subr.mxu0 0.0
    %199 = vmatpush2.msra.mxu0 0.0
    %200 = vmatprep.subr.mxu0 0.0
    %201 = vmatpush2.msra.mxu0 0.0
    %202 = vmatprep.subr.mxu0 0.0
    %203 = vmatpush2.msra.mxu0 0.0
    %204 = vmatprep.subr.mxu0 0.0
    %205 = vmatpush2.msra.mxu0 0.0
    %206 = vmatprep.subr.mxu0 0.0
    %207 = vmatpush2.msra.mxu0 0.0
    %208 = vmatprep.subr.mxu0 0.0
    %209 = vmatpush2.msra.mxu0 0.0
    %210 = vmatprep.subr.mxu0 0.0
    %211 = vmatpush2.msra.mxu0 0.0
    %212 = vmatprep.subr.mxu0 0.0
    %213 = vmatpush2.msra.mxu0 0.0
    %214 = vmatprep.subr.mxu0 0.0
    %215 = vmatpush2.msra.mxu0 0.0
    %216 = vmatprep.subr.mxu0 0.0
    %217 = vmatpush2.msra.mxu0 0.0
    %218 = vmatprep.subr.mxu0 0.0
    %219 = vmatpush2.msra.mxu0 0.0
    %220 = vmatprep.mubr.f32.mxu0 0.0
    %221 = vmatmul.mubr.f32.gmra.mxu0 %v54
    %v222 = vpop.f32.mrf.mxu0
    %v223 = vadd.f32 %v139, %v222
    %v224 = vpop.f32.mrf.mxu0
    %v225 = vadd.f32 %v143, %v224
    %226 = vmatprep.mubr.f32.mxu0 0.0
    %227 = vmatmul.mubr.f32.gmra.mxu0 %v55
    %v228 = vpop.f32.mrf.mxu0
    %v229 = vadd.f32 %v139, %v228
    %v230 = vpop.f32.mrf.mxu0
    %v231 = vadd.f32 %v143, %v230
    %232 = vmatprep.mubr.f32.mxu0 0.0
    %233 = vmatmul.mubr.f32.gmra.mxu0 %v56
    %v234 = vpop.f32.mrf.mxu0
    %v235 = vadd.f32 %v139, %v234
    %v236 = vpop.f32.mrf.mxu0
    %v237 = vadd.f32 %v143, %v236
    %238 = vmatprep.mubr.f32.mxu0 0.0
    %239 = vmatmul.mubr.f32.gmra.mxu0 %v57
    %v240 = vpop.f32.mrf.mxu0
    %v241 = vadd.f32 %v139, %v240
    %v242 = vpop.f32.mrf.mxu0
    %v243 = vadd.f32 %v143, %v242
    %244 = vmatprep.mubr.f32.mxu0 0.0
    %245 = vmatmul.mubr.f32.gmra.mxu0 %v58
    %v246 = vpop.f32.mrf.mxu0
    %v247 = vadd.f32 %v139, %v246
    %v248 = vpop.f32.mrf.mxu0
    %v249 = vadd.f32 %v143, %v248
    %250 = vmatprep.mubr.f32.mxu0 0.0
    %251 = vmatmul.mubr.f32.gmra.mxu0 %v59
    %v252 = vpop.f32.mrf.mxu0
    %v253 = vadd.f32 %v139, %v252
    %v254 = vpop.f32.mrf.mxu0
    %v255 = vadd.f32 %v143, %v254
    %256 = vmatprep.mubr.f32.mxu0 0.0
    %257 = vmatmul.mubr.f32.gmra.mxu0 %v60
    %v258 = vpop.f32.mrf.mxu0
    %v259 = vadd.f32 %v139, %v258
    %v260 = vpop.f32.mrf.mxu0
    %v261 = vadd.f32 %v143, %v260
    %262 = vmatprep.mubr.f32.mxu0 0.0
    %263 = vmatmul.mubr.f32.gmra.mxu0 %v61
    %v264 = vpop.f32.mrf.mxu0
    %v265 = vadd.f32 %v139, %v264
    %v266 = vpop.f32.mrf.mxu0
    %v267 = vadd.f32 %v143, %v266
    %268 = vmatprep.mubr.f32.mxu0 0.0
    %269 = vmatmul.mubr.f32.gmra.mxu0 %v62
    %v270 = vpop.f32.mrf.mxu0
    %v271 = vadd.f32 %v139, %v270
    %v272 = vpop.f32.mrf.mxu0
    %v273 = vadd.f32 %v143, %v272
    %274 = vmatprep.mubr.f32.mxu0 0.0
    %275 = vmatmul.mubr.f32.gmra.mxu0 %v63
    %v276 = vpop.f32.mrf.mxu0
    %v277 = vadd.f32 %v139, %v276
    %v278 = vpop.f32.mrf.mxu0
    %v279 = vadd.f32 %v143, %v278
    %280 = vmatprep.mubr.f32.mxu0 0.0
    %281 = vmatmul.mubr.f32.gmra.mxu0 %v64
    %v282 = vpop.f32.mrf.mxu0
    %v283 = vadd.f32 %v139, %v282
    %v284 = vpop.f32.mrf.mxu0
    %v285 = vadd.f32 %v143, %v284
    %286 = vmatprep.mubr.f32.mxu0 0.0
    %287 = vmatmul.mubr.f32.gmra.mxu0 %v65
    %v288 = vpop.f32.mrf.mxu0
    %v289 = vadd.f32 %v139, %v288
    %v290 = vpop.f32.mrf.mxu0
    %v291 = vadd.f32 %v143, %v290
    %292 = vmatprep.mubr.f32.mxu0 0.0
    %293 = vmatmul.mubr.f32.gmra.mxu0 %v66
    %v294 = vpop.f32.mrf.mxu0
    %v295 = vadd.f32 %v139, %v294
    %v296 = vpop.f32.mrf.mxu0
    %v297 = vadd.f32 %v143, %v296
    %298 = vmatprep.mubr.f32.mxu0 0.0
    %299 = vmatmul.mubr.f32.gmra.mxu0 %v67
    %v300 = vpop.f32.mrf.mxu0
    %v301 = vadd.f32 %v139, %v300
    %v302 = vpop.f32.mrf.mxu0
    %v303 = vadd.f32 %v143, %v302
    %304 = vmatprep.mubr.f32.mxu0 0.0
    %305 = vmatmul.mubr.f32.gmra.mxu0 %v68
    %v306 = vpop.f32.mrf.mxu0
    %v307 = vadd.f32 %v139, %v306
    %v308 = vpop.f32.mrf.mxu0
    %v309 = vadd.f32 %v143, %v308
    %310 = vmatprep.mubr.f32.mxu0 0.0
    %311 = vmatmul.mubr.f32.gmra.mxu0 %v69
    %v312 = vpop.f32.mrf.mxu0
    %v313 = vadd.f32 %v139, %v312
    %v314 = vpop.f32.mrf.mxu0
    %v315 = vadd.f32 %v143, %v314
    %316 = vdwg.mxu0
    %317 = vmatprep.subr.mxu0 %v133
    %318 = vmatpush1.msra.mxu0 %v132
    %319 = vmatprep.subr.mxu0 %v129
    %320 = vmatpush1.msra.mxu0 %v128
    %321 = vmatprep.subr.mxu0 %v125
    %322 = vmatpush1.msra.mxu0 %v124
    %323 = vmatprep.subr.mxu0 %v121
    %324 = vmatpush1.msra.mxu0 %v120
    %325 = vmatprep.subr.mxu0 %v117
    %326 = vmatpush1.msra.mxu0 %v116
    %327 = vmatprep.subr.mxu0 %v113
    %328 = vmatpush1.msra.mxu0 %v112
    %329 = vmatprep.subr.mxu0 %v109
    %330 = vmatpush1.msra.mxu0 %v108
    %331 = vmatprep.subr.mxu0 %v105
    %332 = vmatpush1.msra.mxu0 %v104
    %333 = vmatprep.subr.mxu0 %v101
    %334 = vmatpush1.msra.mxu0 %v100
    %335 = vmatprep.subr.mxu0 %v97
    %336 = vmatpush1.msra.mxu0 %v96
    %337 = vmatprep.subr.mxu0 %v93
    %338 = vmatpush1.msra.mxu0 %v92
    %339 = vmatprep.subr.mxu0 %v89
    %340 = vmatpush1.msra.mxu0 %v88
    %341 = vmatprep.subr.mxu0 %v85
    %342 = vmatpush1.msra.mxu0 %v84
    %343 = vmatprep.subr.mxu0 %v81
    %344 = vmatpush1.msra.mxu0 %v80
    %345 = vmatprep.subr.mxu0 %v77
    %346 = vmatpush1.msra.mxu0 %v76
    %347 = vmatprep.subr.mxu0 %v73
    %348 = vmatpush1.msra.mxu0 %v72
    %349 = vmatprep.subr.mxu0 0.0
    %350 = vmatpush2.msra.mxu0 0.0
    %351 = vmatprep.subr.mxu0 0.0
    %352 = vmatpush2.msra.mxu0 0.0
    %353 = vmatprep.subr.mxu0 0.0
    %354 = vmatpush2.msra.mxu0 0.0
    %355 = vmatprep.subr.mxu0 0.0
    %356 = vmatpush2.msra.mxu0 0.0
    %357 = vmatprep.subr.mxu0 0.0
    %358 = vmatpush2.msra.mxu0 0.0
    %359 = vmatprep.subr.mxu0 0.0
    %360 = vmatpush2.msra.mxu0 0.0
    %361 = vmatprep.subr.mxu0 0.0
    %362 = vmatpush2.msra.mxu0 0.0
    %363 = vmatprep.subr.mxu0 0.0
    %364 = vmatpush2.msra.mxu0 0.0
    %365 = vmatprep.subr.mxu0 0.0
    %366 = vmatpush2.msra.mxu0 0.0
    %367 = vmatprep.subr.mxu0 0.0
    %368 = vmatpush2.msra.mxu0 0.0
    %369 = vmatprep.subr.mxu0 0.0
    %370 = vmatpush2.msra.mxu0 0.0
    %371 = vmatprep.subr.mxu0 0.0
    %372 = vmatpush2.msra.mxu0 0.0
    %373 = vmatprep.subr.mxu0 0.0
    %374 = vmatpush2.msra.mxu0 0.0
    %375 = vmatprep.subr.mxu0 0.0
    %376 = vmatpush2.msra.mxu0 0.0
    %377 = vmatprep.subr.mxu0 0.0
    %378 = vmatpush2.msra.mxu0 0.0
    %379 = vmatprep.subr.mxu0 0.0
    %380 = vmatpush2.msra.mxu0 0.0
    %381 = vmatprep.mubr.f32.mxu0 0.0
    %382 = vmatmul.mubr.f32.gmra.mxu0 %v54
    %v383 = vpop.f32.mrf.mxu0
    %v384 = vadd.f32 %v147, %v383
    %v385 = vpop.f32.mrf.mxu0
    %v386 = vadd.f32 %v151, %v385
    %387 = vmatprep.mubr.f32.mxu0 0.0
    %388 = vmatmul.mubr.f32.gmra.mxu0 %v55
    %v389 = vpop.f32.mrf.mxu0
    %v390 = vadd.f32 %v147, %v389
    %v391 = vpop.f32.mrf.mxu0
    %v392 = vadd.f32 %v151, %v391
    %393 = vmatprep.mubr.f32.mxu0 0.0
    %394 = vmatmul.mubr.f32.gmra.mxu0 %v56
    %v395 = vpop.f32.mrf.mxu0
    %v396 = vadd.f32 %v147, %v395
    %v397 = vpop.f32.mrf.mxu0
    %v398 = vadd.f32 %v151, %v397
    %399 = vmatprep.mubr.f32.mxu0 0.0
    %400 = vmatmul.mubr.f32.gmra.mxu0 %v57
    %v401 = vpop.f32.mrf.mxu0
    %v402 = vadd.f32 %v147, %v401
    %v403 = vpop.f32.mrf.mxu0
    %v404 = vadd.f32 %v151, %v403
    %405 = vmatprep.mubr.f32.mxu0 0.0
    %406 = vmatmul.mubr.f32.gmra.mxu0 %v58
    %v407 = vpop.f32.mrf.mxu0
    %v408 = vadd.f32 %v147, %v407
    %v409 = vpop.f32.mrf.mxu0
    %v410 = vadd.f32 %v151, %v409
    %411 = vmatprep.mubr.f32.mxu0 0.0
    %412 = vmatmul.mubr.f32.gmra.mxu0 %v59
    %v413 = vpop.f32.mrf.mxu0
    %v414 = vadd.f32 %v147, %v413
    %v415 = vpop.f32.mrf.mxu0
    %v416 = vadd.f32 %v151, %v415
    %417 = vmatprep.mubr.f32.mxu0 0.0
    %418 = vmatmul.mubr.f32.gmra.mxu0 %v60
    %v419 = vpop.f32.mrf.mxu0
    %v420 = vadd.f32 %v147, %v419
    %v421 = vpop.f32.mrf.mxu0
    %v422 = vadd.f32 %v151, %v421
    %423 = vmatprep.mubr.f32.mxu0 0.0
    %424 = vmatmul.mubr.f32.gmra.mxu0 %v61
    %v425 = vpop.f32.mrf.mxu0
    %v426 = vadd.f32 %v147, %v425
    %v427 = vpop.f32.mrf.mxu0
    %v428 = vadd.f32 %v151, %v427
    %429 = vmatprep.mubr.f32.mxu0 0.0
    %430 = vmatmul.mubr.f32.gmra.mxu0 %v62
    %v431 = vpop.f32.mrf.mxu0
    %v432 = vadd.f32 %v147, %v431
    %v433 = vpop.f32.mrf.mxu0
    %v434 = vadd.f32 %v151, %v433
    %435 = vmatprep.mubr.f32.mxu0 0.0
    %436 = vmatmul.mubr.f32.gmra.mxu0 %v63
    %v437 = vpop.f32.mrf.mxu0
    %v438 = vadd.f32 %v147, %v437
    %v439 = vpop.f32.mrf.mxu0
    %v440 = vadd.f32 %v151, %v439
    %441 = vmatprep.mubr.f32.mxu0 0.0
    %442 = vmatmul.mubr.f32.gmra.mxu0 %v64
    %v443 = vpop.f32.mrf.mxu0
    %v444 = vadd.f32 %v147, %v443
    %v445 = vpop.f32.mrf.mxu0
    %v446 = vadd.f32 %v151, %v445
    %447 = vmatprep.mubr.f32.mxu0 0.0
    %448 = vmatmul.mubr.f32.gmra.mxu0 %v65
    %v449 = vpop.f32.mrf.mxu0
    %v450 = vadd.f32 %v147, %v449
    %v451 = vpop.f32.mrf.mxu0
    %v452 = vadd.f32 %v151, %v451
    %453 = vmatprep.mubr.f32.mxu0 0.0
    %454 = vmatmul.mubr.f32.gmra.mxu0 %v66
    %v455 = vpop.f32.mrf.mxu0
    %v456 = vadd.f32 %v147, %v455
    %v457 = vpop.f32.mrf.mxu0
    %v458 = vadd.f32 %v151, %v457
    %459 = vmatprep.mubr.f32.mxu0 0.0
    %460 = vmatmul.mubr.f32.gmra.mxu0 %v67
    %v461 = vpop.f32.mrf.mxu0
    %v462 = vadd.f32 %v147, %v461
    %v463 = vpop.f32.mrf.mxu0
    %v464 = vadd.f32 %v151, %v463
    %465 = vmatprep.mubr.f32.mxu0 0.0
    %466 = vmatmul.mubr.f32.gmra.mxu0 %v68
    %v467 = vpop.f32.mrf.mxu0
    %v468 = vadd.f32 %v147, %v467
    %v469 = vpop.f32.mrf.mxu0
    %v470 = vadd.f32 %v151, %v469
    %471 = vmatprep.mubr.f32.mxu0 0.0
    %472 = vmatmul.mubr.f32.gmra.mxu0 %v69
    %v473 = vpop.f32.mrf.mxu0
    %v474 = vadd.f32 %v147, %v473
    %v475 = vpop.f32.mrf.mxu0
    %v476 = vadd.f32 %v151, %v475
    %477 = vdwg.mxu0
    %478 = vst [vmem:[#allocation8] sm:$0xff] %v223
    %479 = vst [vmem:[#allocation8 + $0x8] sm:$0xff] %v225
    %480 = vst [vmem:[#allocation8 + $0x10] sm:$0xff] %v384
    %481 = vst [vmem:[#allocation8 + $0x18] sm:$0xff] %v386
    %482 = vst [vmem:[#allocation8 + $0x20] sm:$0xff] %v229
    %483 = vst [vmem:[#allocation8 + $0x28] sm:$0xff] %v231
    %484 = vst [vmem:[#allocation8 + $0x30] sm:$0xff] %v390
    %485 = vst [vmem:[#allocation8 + $0x38] sm:$0xff] %v392
    %486 = vst [vmem:[#allocation8 + $0x40] sm:$0xff] %v235
    %487 = vst [vmem:[#allocation8 + $0x48] sm:$0xff] %v237
    %488 = vst [vmem:[#allocation8 + $0x50] sm:$0xff] %v396
    %489 = vst [vmem:[#allocation8 + $0x58] sm:$0xff] %v398
    %490 = vst [vmem:[#allocation8 + $0x60] sm:$0xff] %v241
    %491 = vst [vmem:[#allocation8 + $0x68] sm:$0xff] %v243
    %492 = vst [vmem:[#allocation8 + $0x70] sm:$0xff] %v402
    %493 = vst [vmem:[#allocation8 + $0x78] sm:$0xff] %v404
    %494 = vst [vmem:[#allocation8 + $0x80] sm:$0xff] %v247
    %495 = vst [vmem:[#allocation8 + $0x88] sm:$0xff] %v249
    %496 = vst [vmem:[#allocation8 + $0x90] sm:$0xff] %v408
    %497 = vst [vmem:[#allocation8 + $0x98] sm:$0xff] %v410
    %498 = vst [vmem:[#allocation8 + $0xa0] sm:$0xff] %v253
    %499 = vst [vmem:[#allocation8 + $0xa8] sm:$0xff] %v255
    %500 = vst [vmem:[#allocation8 + $0xb0] sm:$0xff] %v414
    %501 = vst [vmem:[#allocation8 + $0xb8] sm:$0xff] %v416
    %502 = vst [vmem:[#allocation8 + $0xc0] sm:$0xff] %v259
    %503 = vst [vmem:[#allocation8 + $0xc8] sm:$0xff] %v261
    %504 = vst [vmem:[#allocation8 + $0xd0] sm:$0xff] %v420
    %505 = vst [vmem:[#allocation8 + $0xd8] sm:$0xff] %v422
    %506 = vst [vmem:[#allocation8 + $0xe0] sm:$0xff] %v265
    %507 = vst [vmem:[#allocation8 + $0xe8] sm:$0xff] %v267
    %508 = vst [vmem:[#allocation8 + $0xf0] sm:$0xff] %v426
    %509 = vst [vmem:[#allocation8 + $0xf8] sm:$0xff] %v428
    %510 = vst [vmem:[#allocation8 + $0x100] sm:$0xff] %v271
    %511 = vst [vmem:[#allocation8 + $0x108] sm:$0xff] %v273
    %512 = vst [vmem:[#allocation8 + $0x110] sm:$0xff] %v432
    %513 = vst [vmem:[#allocation8 + $0x118] sm:$0xff] %v434
    %514 = vst [vmem:[#allocation8 + $0x120] sm:$0xff] %v277
    %515 = vst [vmem:[#allocation8 + $0x128] sm:$0xff] %v279
    %516 = vst [vmem:[#allocation8 + $0x130] sm:$0xff] %v438
    %517 = vst [vmem:[#allocation8 + $0x138] sm:$0xff] %v440
    %518 = vst [vmem:[#allocation8 + $0x140] sm:$0xff] %v283
    %519 = vst [vmem:[#allocation8 + $0x148] sm:$0xff] %v285
    %520 = vst [vmem:[#allocation8 + $0x150] sm:$0xff] %v444
    %521 = vst [vmem:[#allocation8 + $0x158] sm:$0xff] %v446
    %522 = vst [vmem:[#allocation8 + $0x160] sm:$0xff] %v289
    %523 = vst [vmem:[#allocation8 + $0x168] sm:$0xff] %v291
    %524 = vst [vmem:[#allocation8 + $0x170] sm:$0xff] %v450
    %525 = vst [vmem:[#allocation8 + $0x178] sm:$0xff] %v452
    %526 = vst [vmem:[#allocation8 + $0x180] sm:$0xff] %v295
    %527 = vst [vmem:[#allocation8 + $0x188] sm:$0xff] %v297
    %528 = vst [vmem:[#allocation8 + $0x190] sm:$0xff] %v456
    %529 = vst [vmem:[#allocation8 + $0x198] sm:$0xff] %v458
    %530 = vst [vmem:[#allocation8 + $0x1a0] sm:$0xff] %v301
    %531 = vst [vmem:[#allocation8 + $0x1a8] sm:$0xff] %v303
    %532 = vst [vmem:[#allocation8 + $0x1b0] sm:$0xff] %v462
    %533 = vst [vmem:[#allocation8 + $0x1b8] sm:$0xff] %v464
    %534 = vst [vmem:[#allocation8 + $0x1c0] sm:$0xff] %v307
    %535 = vst [vmem:[#allocation8 + $0x1c8] sm:$0xff] %v309
    %536 = vst [vmem:[#allocation8 + $0x1d0] sm:$0xff] %v468
    %537 = vst [vmem:[#allocation8 + $0x1d8] sm:$0xff] %v470
    %538 = vst [vmem:[#allocation8 + $0x1e0] sm:$0xff] %v313
    %539 = vst [vmem:[#allocation8 + $0x1e8] sm:$0xff] %v315
    %540 = vst [vmem:[#allocation8 + $0x1f0] sm:$0xff] %v474
    %541 = vst [vmem:[#allocation8 + $0x1f8] sm:$0xff] %v476
    // Predicated region
    $region26: #{tpu_custom_call.1} parent=1 // pred_check
      _
    $region27: #{tpu_custom_call.1} parent=1 // pred_check_branch
      %543 = sbr.rel (0) target = $region29
    $region28: #{tpu_custom_call.1} parent=1 // pred_region
      %s545 = ssub.s32 8192, 8192
      %546 = vsyncadd [#allocation4], %s545
      %s547 = sshll.u32 [#allocation8], 4
      %s548 = int_to_ptr.vmem [resolvable:$true] %s547
      %553 = dma.vmem_to_hbm [thread:$0]  %s548, 8192, %s3, [#allocation4], 512, 512, 32
    $region29: #{tpu_custom_call.1} parent=1 // pred_fallthru
      _
    // Predicated region
    $region30: #{tpu_custom_call.1} parent=1 // pred_check
      _
    $region31: #{tpu_custom_call.1} parent=1 // pred_check_branch
      %555 = sbr.rel (0) target = $region33
    $region32: #{tpu_custom_call.1} parent=1 // pred_region
      %556 = dma.done [#allocation4], 8192
    $region33: #{tpu_custom_call.1} parent=1 // pred_fallthru
      _
    %557 = vsyncpa [#allocation3], 1
    %558 = vsyncpa [#allocation6], 1
    %559 = vsyncpa [#allocation4], 1

</llo_original>
